<compile_context>
chip_gen: v7x
topology: tpu7x:2x2x1
jax: 0.10.0
libtpu: 0.0.40
codegen_flags: <defaults>
</compile_context>

<pallas_src>
import jax
import jax.numpy as jnp
import numpy as np
from jax.experimental import pallas as pl
from jax.experimental.pallas import tpu as pltpu

N_CFG = 3          # cond / img_cond / uncond
C = 4              # latent channels
H = W = 16
HW = H * W
SEQ = 8            # cross-attn tokens
DCTX = 32          # cross-attn hidden


def cfg_denoiser_kernel(sc_ref, z_ref, cc_c_ref, cc_u_ref, ctx_c_ref, ctx_u_ref,
                        w_z_ref, w_cc_ref, b_ref, w_ctx_t_ref, o_ref):
    # sc_ref (SMEM, f32[3]) = [text_cfg_scale, image_cfg_scale, c_out]
    z = z_ref[...]                      # [C, HW]
    cc_c = cc_c_ref[...]                # [C, HW]  cond['c_concat']
    cc_u = cc_u_ref[...]                # [C, HW]  uncond['c_concat']

    w_z = w_z_ref[...]                  # [C, C]
    w_cc = w_cc_ref[...]                # [C, C]

    # Synthetic inner model, 1x1 conv over [z ++ c_concat] channels.
    # K is tiny (4) so do it as VPU broadcast-FMAs instead of MXU matmuls.
    def conv1x1(w, x):                  # w: [C, C], x: [C, HW] -> [C, HW]
        acc = w[:, 0:1] * x[0:1, :]
        for c in range(1, C):           # static unroll, C=4
            acc = acc + w[:, c:c + 1] * x[c:c + 1, :]
        return acc

    # cfg_z repeats z for all 3 branches -> w_z@z is shared; cond['c_concat']
    # feeds branches {cond, img_cond} -> w_cc@cc_cond is shared.
    conv_z       = conv1x1(w_z, z)
    conv_cc_cond = conv1x1(w_cc, cc_c)
    conv_cc_unc  = conv1x1(w_cc, cc_u)

    # Cross-attn context: mean over tokens, project to a per-channel bias.
    # Done as VPU multiply + XLU reductions (no MXU, no transposes in-kernel).
    w_ctx_t = w_ctx_t_ref[...]          # [C, DCTX] (pre-transposed in wrapper)

    def ctx_proj(ctx_ref):
        m = jnp.mean(ctx_ref[...], axis=0, keepdims=True)       # [1, DCTX]
        return jnp.sum(w_ctx_t * m, axis=1, keepdims=True)      # [C, 1]

    proj_cond = ctx_proj(ctx_c_ref)     # branch 0 uses cond crossattn
    proj_unc  = ctx_proj(ctx_u_ref)     # branches 1, 2 use uncond crossattn

    b = b_ref[...]                      # [C, 1]
    c_out = sc_ref[2]                   # 1/(sigma^2+1), same for all branches

    out_cond     = (conv_z + conv_cc_cond + b + proj_cond) * c_out
    out_img_cond = (conv_z + conv_cc_cond + b + proj_unc) * c_out
    out_uncond   = (conv_z + conv_cc_unc  + b + proj_unc) * c_out

    # CFG combination (the CFGDenoiser hot path)
    t_scale = sc_ref[0]
    i_scale = sc_ref[1]
    o_ref[...] = (out_uncond
                  + t_scale * (out_cond - out_img_cond)
                  + i_scale * (out_img_cond - out_uncond))


def cfg_denoiser(z, sigma, cond, uncond, text_cfg_scale, image_cfg_scale, params):
    """Mirrors CFGDenoiser.forward. z: [1,C,H,W], sigma: [1].

    The einops.repeat / torch.cat CFG batching is *not* materialized: all 3
    branches share z/sigma, branches {cond, img_cond} share cond['c_concat'],
    branches {img_cond, uncond} share uncond['c_crossattn'], so every distinct
    tensor is shipped to the kernel exactly once.
    """
    z2d   = z.reshape(C, HW).astype(jnp.float32)
    cc_c  = cond['c_concat'][0].reshape(C, HW).astype(jnp.float32)
    cc_u  = uncond['c_concat'][0].reshape(C, HW).astype(jnp.float32)
    ctx_c = cond['c_crossattn'][0].reshape(SEQ, DCTX).astype(jnp.float32)
    ctx_u = uncond['c_crossattn'][0].reshape(SEQ, DCTX).astype(jnp.float32)

    # sigma conditioning is a single scalar (sigma repeated 3x is identical).
    c_out = 1.0 / (sigma[0].astype(jnp.float32) ** 2 + 1.0)
    scalars = jnp.stack([jnp.asarray(text_cfg_scale, jnp.float32),
                         jnp.asarray(image_cfg_scale, jnp.float32),
                         c_out])                                  # f32[3] -> SMEM

    # Split the 1x1-conv weight over the [z ++ c_concat] channel concat
    # (algebraically identical; removes the in-kernel concat relayout).
    w_z  = params['w_conv'][:, :C].astype(jnp.float32)            # [C, C]
    w_cc = params['w_conv'][:, C:].astype(jnp.float32)            # [C, C]
    w_ctx_t = params['w_ctx'].T.astype(jnp.float32)               # [C, DCTX]
    b_conv = params['b_conv'].astype(jnp.float32)                 # [C, 1]

    vmem = pl.BlockSpec(memory_space=pltpu.MemorySpace.VMEM)
    out = pl.pallas_call(
        cfg_denoiser_kernel,
        out_shape=jax.ShapeDtypeStruct((C, HW), jnp.float32),
        # single grid-less invocation: whole problem (~20 KB) in one block
        in_specs=[
            pl.BlockSpec(memory_space=pltpu.MemorySpace.SMEM),    # scalars
            vmem,                                                 # z
            vmem,                                                 # c_concat (cond)
            vmem,                                                 # c_concat (uncond)
            vmem,                                                 # c_crossattn (cond)
            vmem,                                                 # c_crossattn (uncond)
            vmem,                                                 # w_z
            vmem,                                                 # w_cc
            vmem,                                                 # b_conv
            vmem,                                                 # w_ctx^T
        ],
        out_specs=vmem,
    )(scalars, z2d, cc_c, cc_u, ctx_c, ctx_u, w_z, w_cc, b_conv, w_ctx_t)

    return out.reshape(1, C, H, W)                                # NCHW like z


def cfg_denoiser_ref(z, sigma, cond, uncond, text_cfg_scale, image_cfg_scale, params):
    """Pure-JAX reference of the same semantics (explicit CFG batching)."""
    cfg_z = jnp.repeat(z, N_CFG, axis=0)
    cfg_sigma = jnp.repeat(sigma, N_CFG, axis=0)
    ctx = jnp.concatenate([cond['c_crossattn'][0], uncond['c_crossattn'][0],
                           uncond['c_crossattn'][0]], axis=0)
    cc = jnp.concatenate([cond['c_concat'][0], cond['c_concat'][0],
                          uncond['c_concat'][0]], axis=0)
    zf = cfg_z.reshape(N_CFG, C, HW)
    ccf = cc.reshape(N_CFG, C, HW)
    h = jnp.concatenate([zf, ccf], axis=1)
    conv = jnp.einsum('oc,ncw->now', params['w_conv'], h) + params['b_conv'][None]
    ctx_proj = ctx.mean(axis=1) @ params['w_ctx']
    c_out = 1.0 / (cfg_sigma[:, None, None] ** 2 + 1.0)
    out = (conv + ctx_proj[:, :, None]) * c_out
    out_cond, out_img_cond, out_uncond = out[0], out[1], out[2]
    res = (out_uncond + text_cfg_scale * (out_cond - out_img_cond)
           + image_cfg_scale * (out_img_cond - out_uncond))
    return res.reshape(1, C, H, W)


if __name__ == "__main__":
    key = jax.random.PRNGKey(0)
    k_z, k_cc_c, k_cc_u, k_tx_c, k_tx_u, k_w1, k_w2 = jax.random.split(key, 7)

    z = jax.random.normal(k_z, (1, C, H, W), jnp.float32)
    sigma = jnp.array([0.7], dtype=jnp.float32)
    cond = {
        'c_crossattn': [jax.random.normal(k_tx_c, (1, SEQ, DCTX), jnp.float32)],
        'c_concat':    [jax.random.normal(k_cc_c, (1, C, H, W), jnp.float32)],
    }
    uncond = {
        'c_crossattn': [jax.random.normal(k_tx_u, (1, SEQ, DCTX), jnp.float32)],
        'c_concat':    [jax.random.normal(k_cc_u, (1, C, H, W), jnp.float32)],
    }
    # deterministic synthetic inner-model parameters
    # TODO(synk): the real inner_model is an arbitrary (nonlinear) diffusion
    # UNet; it is replaced here by this synthetic linear denoiser.
    params = {
        'w_conv': 0.1 * jax.random.normal(k_w1, (C, 2 * C), jnp.float32),
        'b_conv': 0.05 * jnp.arange(C, dtype=jnp.float32).reshape(C, 1),
        'w_ctx':  0.1 * jax.random.normal(k_w2, (DCTX, C), jnp.float32),
    }
    text_cfg_scale = 7.5
    image_cfg_scale = 1.5

    out = cfg_denoiser(z, sigma, cond, uncond, text_cfg_scale, image_cfg_scale, params)
    out = jax.block_until_ready(out)

    ref = cfg_denoiser_ref(z, sigma, cond, uncond, text_cfg_scale, image_cfg_scale, params)
    np.testing.assert_allclose(np.asarray(out), np.asarray(ref), rtol=1e-3, atol=1e-3)

    print("KERNEL_OK")
</pallas_src>

<mosaic_0001>
module attributes {stable_mosaic.version = 11 : i64} {
  func.func @cfg_denoiser_kernel(%arg0: memref<3xf32, #tpu.memory_space<smem>>, %arg1: memref<4x256xf32, #tpu.memory_space<vmem>>, %arg2: memref<4x256xf32, #tpu.memory_space<vmem>>, %arg3: memref<4x256xf32, #tpu.memory_space<vmem>>, %arg4: memref<8x32xf32, #tpu.memory_space<vmem>>, %arg5: memref<8x32xf32, #tpu.memory_space<vmem>>, %arg6: memref<4x4xf32, #tpu.memory_space<vmem>>, %arg7: memref<4x4xf32, #tpu.memory_space<vmem>>, %arg8: memref<4x1xf32, #tpu.memory_space<vmem>>, %arg9: memref<4x32xf32, #tpu.memory_space<vmem>>, %arg10: memref<4x256xf32, #tpu.memory_space<vmem>>) attributes {dimension_semantics = [], scalar_prefetch = 0 : i64, scratch_operands = 0 : i64, tpu.core_type = #tpu.core_type<tc>} {
    %c0 = arith.constant 0 : index
    %c0_0 = arith.constant 0 : index
    %0 = vector.load %arg1[%c0, %c0_0] : memref<4x256xf32, #tpu.memory_space<vmem>>, vector<4x256xf32>
    %c0_1 = arith.constant 0 : index
    %c0_2 = arith.constant 0 : index
    %1 = vector.load %arg2[%c0_1, %c0_2] : memref<4x256xf32, #tpu.memory_space<vmem>>, vector<4x256xf32>
    %c0_3 = arith.constant 0 : index
    %c0_4 = arith.constant 0 : index
    %2 = vector.load %arg3[%c0_3, %c0_4] : memref<4x256xf32, #tpu.memory_space<vmem>>, vector<4x256xf32>
    %c0_5 = arith.constant 0 : index
    %c0_6 = arith.constant 0 : index
    %3 = vector.load %arg6[%c0_5, %c0_6] : memref<4x4xf32, #tpu.memory_space<vmem>>, vector<4x4xf32>
    %c0_7 = arith.constant 0 : index
    %c0_8 = arith.constant 0 : index
    %4 = vector.load %arg7[%c0_7, %c0_8] : memref<4x4xf32, #tpu.memory_space<vmem>>, vector<4x4xf32>
    %5 = vector.extract_strided_slice %3 {offsets = [0, 0], sizes = [4, 1], strides = [1, 1]} : vector<4x4xf32> to vector<4x1xf32>
    %6 = vector.extract_strided_slice %0 {offsets = [0, 0], sizes = [1, 256], strides = [1, 1]} : vector<4x256xf32> to vector<1x256xf32>
    %7 = vector.broadcast %5 : vector<4x1xf32> to vector<4x256xf32>
    %8 = vector.broadcast %6 : vector<1x256xf32> to vector<4x256xf32>
    %9 = arith.mulf %7, %8 : vector<4x256xf32>
    %10 = vector.extract_strided_slice %3 {offsets = [0, 1], sizes = [4, 1], strides = [1, 1]} : vector<4x4xf32> to vector<4x1xf32>
    %11 = vector.extract_strided_slice %0 {offsets = [1, 0], sizes = [1, 256], strides = [1, 1]} : vector<4x256xf32> to vector<1x256xf32>
    %12 = vector.broadcast %10 : vector<4x1xf32> to vector<4x256xf32>
    %13 = vector.broadcast %11 : vector<1x256xf32> to vector<4x256xf32>
    %14 = arith.mulf %12, %13 : vector<4x256xf32>
    %15 = arith.addf %9, %14 : vector<4x256xf32>
    %16 = vector.extract_strided_slice %3 {offsets = [0, 2], sizes = [4, 1], strides = [1, 1]} : vector<4x4xf32> to vector<4x1xf32>
    %17 = vector.extract_strided_slice %0 {offsets = [2, 0], sizes = [1, 256], strides = [1, 1]} : vector<4x256xf32> to vector<1x256xf32>
    %18 = vector.broadcast %16 : vector<4x1xf32> to vector<4x256xf32>
    %19 = vector.broadcast %17 : vector<1x256xf32> to vector<4x256xf32>
    %20 = arith.mulf %18, %19 : vector<4x256xf32>
    %21 = arith.addf %15, %20 : vector<4x256xf32>
    %22 = vector.extract_strided_slice %3 {offsets = [0, 3], sizes = [4, 1], strides = [1, 1]} : vector<4x4xf32> to vector<4x1xf32>
    %23 = vector.extract_strided_slice %0 {offsets = [3, 0], sizes = [1, 256], strides = [1, 1]} : vector<4x256xf32> to vector<1x256xf32>
    %24 = vector.broadcast %22 : vector<4x1xf32> to vector<4x256xf32>
    %25 = vector.broadcast %23 : vector<1x256xf32> to vector<4x256xf32>
    %26 = arith.mulf %24, %25 : vector<4x256xf32>
    %27 = arith.addf %21, %26 : vector<4x256xf32>
    %28 = vector.extract_strided_slice %4 {offsets = [0, 0], sizes = [4, 1], strides = [1, 1]} : vector<4x4xf32> to vector<4x1xf32>
    %29 = vector.extract_strided_slice %1 {offsets = [0, 0], sizes = [1, 256], strides = [1, 1]} : vector<4x256xf32> to vector<1x256xf32>
    %30 = vector.broadcast %28 : vector<4x1xf32> to vector<4x256xf32>
    %31 = vector.broadcast %29 : vector<1x256xf32> to vector<4x256xf32>
    %32 = arith.mulf %30, %31 : vector<4x256xf32>
    %33 = vector.extract_strided_slice %4 {offsets = [0, 1], sizes = [4, 1], strides = [1, 1]} : vector<4x4xf32> to vector<4x1xf32>
    %34 = vector.extract_strided_slice %1 {offsets = [1, 0], sizes = [1, 256], strides = [1, 1]} : vector<4x256xf32> to vector<1x256xf32>
    %35 = vector.broadcast %33 : vector<4x1xf32> to vector<4x256xf32>
    %36 = vector.broadcast %34 : vector<1x256xf32> to vector<4x256xf32>
    %37 = arith.mulf %35, %36 : vector<4x256xf32>
    %38 = arith.addf %32, %37 : vector<4x256xf32>
    %39 = vector.extract_strided_slice %4 {offsets = [0, 2], sizes = [4, 1], strides = [1, 1]} : vector<4x4xf32> to vector<4x1xf32>
    %40 = vector.extract_strided_slice %1 {offsets = [2, 0], sizes = [1, 256], strides = [1, 1]} : vector<4x256xf32> to vector<1x256xf32>
    %41 = vector.broadcast %39 : vector<4x1xf32> to vector<4x256xf32>
    %42 = vector.broadcast %40 : vector<1x256xf32> to vector<4x256xf32>
    %43 = arith.mulf %41, %42 : vector<4x256xf32>
    %44 = arith.addf %38, %43 : vector<4x256xf32>
    %45 = vector.extract_strided_slice %4 {offsets = [0, 3], sizes = [4, 1], strides = [1, 1]} : vector<4x4xf32> to vector<4x1xf32>
    %46 = vector.extract_strided_slice %1 {offsets = [3, 0], sizes = [1, 256], strides = [1, 1]} : vector<4x256xf32> to vector<1x256xf32>
    %47 = vector.broadcast %45 : vector<4x1xf32> to vector<4x256xf32>
    %48 = vector.broadcast %46 : vector<1x256xf32> to vector<4x256xf32>
    %49 = arith.mulf %47, %48 : vector<4x256xf32>
    %50 = arith.addf %44, %49 : vector<4x256xf32>
    %51 = vector.extract_strided_slice %4 {offsets = [0, 0], sizes = [4, 1], strides = [1, 1]} : vector<4x4xf32> to vector<4x1xf32>
    %52 = vector.extract_strided_slice %2 {offsets = [0, 0], sizes = [1, 256], strides = [1, 1]} : vector<4x256xf32> to vector<1x256xf32>
    %53 = vector.broadcast %51 : vector<4x1xf32> to vector<4x256xf32>
    %54 = vector.broadcast %52 : vector<1x256xf32> to vector<4x256xf32>
    %55 = arith.mulf %53, %54 : vector<4x256xf32>
    %56 = vector.extract_strided_slice %4 {offsets = [0, 1], sizes = [4, 1], strides = [1, 1]} : vector<4x4xf32> to vector<4x1xf32>
    %57 = vector.extract_strided_slice %2 {offsets = [1, 0], sizes = [1, 256], strides = [1, 1]} : vector<4x256xf32> to vector<1x256xf32>
    %58 = vector.broadcast %56 : vector<4x1xf32> to vector<4x256xf32>
    %59 = vector.broadcast %57 : vector<1x256xf32> to vector<4x256xf32>
    %60 = arith.mulf %58, %59 : vector<4x256xf32>
    %61 = arith.addf %55, %60 : vector<4x256xf32>
    %62 = vector.extract_strided_slice %4 {offsets = [0, 2], sizes = [4, 1], strides = [1, 1]} : vector<4x4xf32> to vector<4x1xf32>
    %63 = vector.extract_strided_slice %2 {offsets = [2, 0], sizes = [1, 256], strides = [1, 1]} : vector<4x256xf32> to vector<1x256xf32>
    %64 = vector.broadcast %62 : vector<4x1xf32> to vector<4x256xf32>
    %65 = vector.broadcast %63 : vector<1x256xf32> to vector<4x256xf32>
    %66 = arith.mulf %64, %65 : vector<4x256xf32>
    %67 = arith.addf %61, %66 : vector<4x256xf32>
    %68 = vector.extract_strided_slice %4 {offsets = [0, 3], sizes = [4, 1], strides = [1, 1]} : vector<4x4xf32> to vector<4x1xf32>
    %69 = vector.extract_strided_slice %2 {offsets = [3, 0], sizes = [1, 256], strides = [1, 1]} : vector<4x256xf32> to vector<1x256xf32>
    %70 = vector.broadcast %68 : vector<4x1xf32> to vector<4x256xf32>
    %71 = vector.broadcast %69 : vector<1x256xf32> to vector<4x256xf32>
    %72 = arith.mulf %70, %71 : vector<4x256xf32>
    %73 = arith.addf %67, %72 : vector<4x256xf32>
    %c0_9 = arith.constant 0 : index
    %c0_10 = arith.constant 0 : index
    %74 = vector.load %arg9[%c0_9, %c0_10] : memref<4x32xf32, #tpu.memory_space<vmem>>, vector<4x32xf32>
    %c0_11 = arith.constant 0 : index
    %c0_12 = arith.constant 0 : index
    %75 = vector.load %arg4[%c0_11, %c0_12] : memref<8x32xf32, #tpu.memory_space<vmem>>, vector<8x32xf32>
    %cst = arith.constant dense<0.000000e+00> : vector<32xf32>
    %76 = vector.multi_reduction <add>, %75, %cst [0] : vector<8x32xf32> to vector<32xf32>
    %77 = vector.shape_cast %76 : vector<32xf32> to vector<1x32xf32>
    %cst_13 = arith.constant 8.000000e+00 : f32
    %78 = vector.broadcast %cst_13 : f32 to vector<1x32xf32>
    %79 = arith.divf %77, %78 : vector<1x32xf32>
    %80 = vector.broadcast %79 : vector<1x32xf32> to vector<4x32xf32>
    %81 = arith.mulf %74, %80 : vector<4x32xf32>
    %cst_14 = arith.constant dense<0.000000e+00> : vector<4xf32>
    %82 = vector.multi_reduction <add>, %81, %cst_14 [1] : vector<4x32xf32> to vector<4xf32>
    %83 = vector.shape_cast %82 : vector<4xf32> to vector<4x1xf32>
    %c0_15 = arith.constant 0 : index
    %c0_16 = arith.constant 0 : index
    %84 = vector.load %arg5[%c0_15, %c0_16] : memref<8x32xf32, #tpu.memory_space<vmem>>, vector<8x32xf32>
    %cst_17 = arith.constant dense<0.000000e+00> : vector<32xf32>
    %85 = vector.multi_reduction <add>, %84, %cst_17 [0] : vector<8x32xf32> to vector<32xf32>
    %86 = vector.shape_cast %85 : vector<32xf32> to vector<1x32xf32>
    %cst_18 = arith.constant 8.000000e+00 : f32
    %87 = vector.broadcast %cst_18 : f32 to vector<1x32xf32>
    %88 = arith.divf %86, %87 : vector<1x32xf32>
    %89 = vector.broadcast %88 : vector<1x32xf32> to vector<4x32xf32>
    %90 = arith.mulf %74, %89 : vector<4x32xf32>
    %cst_19 = arith.constant dense<0.000000e+00> : vector<4xf32>
    %91 = vector.multi_reduction <add>, %90, %cst_19 [1] : vector<4x32xf32> to vector<4xf32>
    %92 = vector.shape_cast %91 : vector<4xf32> to vector<4x1xf32>
    %c0_20 = arith.constant 0 : index
    %c0_21 = arith.constant 0 : index
    %93 = vector.load %arg8[%c0_20, %c0_21] : memref<4x1xf32, #tpu.memory_space<vmem>>, vector<4x1xf32>
    %c2 = arith.constant 2 : index
    %94 = memref.load %arg0[%c2] : memref<3xf32, #tpu.memory_space<smem>>
    %95 = arith.addf %27, %50 : vector<4x256xf32>
    %96 = vector.broadcast %93 : vector<4x1xf32> to vector<4x256xf32>
    %97 = arith.addf %95, %96 : vector<4x256xf32>
    %98 = vector.broadcast %83 : vector<4x1xf32> to vector<4x256xf32>
    %99 = arith.addf %97, %98 : vector<4x256xf32>
    %100 = vector.broadcast %94 : f32 to vector<4x256xf32>
    %101 = arith.mulf %99, %100 : vector<4x256xf32>
    %102 = arith.addf %27, %50 : vector<4x256xf32>
    %103 = vector.broadcast %93 : vector<4x1xf32> to vector<4x256xf32>
    %104 = arith.addf %102, %103 : vector<4x256xf32>
    %105 = vector.broadcast %92 : vector<4x1xf32> to vector<4x256xf32>
    %106 = arith.addf %104, %105 : vector<4x256xf32>
    %107 = vector.broadcast %94 : f32 to vector<4x256xf32>
    %108 = arith.mulf %106, %107 : vector<4x256xf32>
    %109 = arith.addf %27, %73 : vector<4x256xf32>
    %110 = vector.broadcast %93 : vector<4x1xf32> to vector<4x256xf32>
    %111 = arith.addf %109, %110 : vector<4x256xf32>
    %112 = vector.broadcast %92 : vector<4x1xf32> to vector<4x256xf32>
    %113 = arith.addf %111, %112 : vector<4x256xf32>
    %114 = vector.broadcast %94 : f32 to vector<4x256xf32>
    %115 = arith.mulf %113, %114 : vector<4x256xf32>
    %c0_22 = arith.constant 0 : index
    %116 = memref.load %arg0[%c0_22] : memref<3xf32, #tpu.memory_space<smem>>
    %c1 = arith.constant 1 : index
    %117 = memref.load %arg0[%c1] : memref<3xf32, #tpu.memory_space<smem>>
    %118 = arith.subf %101, %108 : vector<4x256xf32>
    %119 = vector.broadcast %116 : f32 to vector<4x256xf32>
    %120 = arith.mulf %119, %118 : vector<4x256xf32>
    %121 = arith.addf %115, %120 : vector<4x256xf32>
    %122 = arith.subf %108, %115 : vector<4x256xf32>
    %123 = vector.broadcast %117 : f32 to vector<4x256xf32>
    %124 = arith.mulf %123, %122 : vector<4x256xf32>
    %125 = arith.addf %121, %124 : vector<4x256xf32>
    %c0_23 = arith.constant 0 : index
    %c0_24 = arith.constant 0 : index
    %126 = vector.load %arg10[%c0_23, %c0_24] : memref<4x256xf32, #tpu.memory_space<vmem>>, vector<4x256xf32>
    tpu.vector_store %arg10[%c0_23, %c0_24], %125 {strides = array<i32>} : memref<4x256xf32, #tpu.memory_space<vmem>>, vector<4x256xf32>,
    return
  }
}

</mosaic_0001>

<llo_original>
// kernel: tpu_custom_call.1
$region0: #{tpu_custom_call.1}
  #allocation0 [shape = 'u32[]', space=smem, size = 0x4, offset = 0x4, fixed_abs, tag = 'smem constant byte address 0x4 - core index']
  #allocation1 [shape = 'u32[144,128]{1,0:T(1,128)}', space=vmem, size = 0x12000, scoped, tag = 'internal scratch']
  %s0 = inlined_call_operand.hbm [shape: f32[3], index: 0, kind: input, shape index: {}]
  %s1 = inlined_call_operand.vmem [shape: f32[4,256], index: 1, kind: input, shape index: {}]
  %s2 = inlined_call_operand.hbm [shape: f32[4,256], index: 2, kind: input, shape index: {}]
  %s3 = inlined_call_operand.vmem [shape: f32[4,256], index: 3, kind: input, shape index: {}]
  %s4 = inlined_call_operand.hbm [shape: f32[8,32], index: 4, kind: input, shape index: {}]
  %s5 = inlined_call_operand.hbm [shape: f32[8,32], index: 5, kind: input, shape index: {}]
  %s6 = inlined_call_operand.vmem [shape: f32[4,4], index: 6, kind: input, shape index: {}]
  %s7 = inlined_call_operand.vmem [shape: f32[4,4], index: 7, kind: input, shape index: {}]
  %s8 = inlined_call_operand.vmem [shape: f32[4,1], index: 8, kind: input, shape index: {}]
  %s9 = inlined_call_operand.vmem [shape: f32[4,32], index: 9, kind: input, shape index: {}]
  %s10 = inlined_call_operand.hbm [shape: f32[4,256], index: 10, kind: output, shape index: {}]
  %s11 = sld [smem:[#allocation0]]
  $region66: #{tpu_custom_call.1} parent=0
    _
  %s13 = ssub.s32 1, %s11
  %s14 = scalar_select 0, %s13, %s11
  $region1: #{tpu_custom_call.1} parent=0
    #allocation2 [shape = 'u8[512]{0}', space=smem, size = 0x200, scoped, tag = 'input window, operand 0, single buffered']
    #allocation3 [shape = 's32[1]{0}', space=sflag, size = 0x4, scoped, tag = 'scoped memory for tpu_custom_call.1']
    #allocation4 [shape = 's32[1]{0}', space=sflag, size = 0x4, scoped, tag = 'scoped memory for tpu_custom_call.1']
    #allocation5 [shape = 's32[1]{0}', space=sflag, size = 0x4, scoped, tag = 'scoped memory for tpu_custom_call.1']
    #allocation6 [shape = 'u8[4096]{0}', space=vmem, size = 0x1000, scoped, tag = 'input window, operand 2, single buffered']
    #allocation7 [shape = 'u8[4096]{0}', space=vmem, size = 0x1000, scoped, tag = 'input window, operand 4, single buffered']
    #allocation8 [shape = 's32[1]{0}', space=sflag, size = 0x4, scoped, tag = 'scoped memory for tpu_custom_call.1']
    #allocation9 [shape = 'u8[4096]{0}', space=vmem, size = 0x1000, scoped, tag = 'input window, operand 5, single buffered']
    #allocation10 [shape = 'u8[4096]{0}', space=vmem, size = 0x1000, scoped, tag = 'output window, operand 0, single buffered']
    %15 = vsyncpa [#allocation5], 0
    %16 = vsyncpa [#allocation3], 0
    %17 = vsyncpa [#allocation8], 0
    %18 = vsyncpa [#allocation4], 0
    // Predicated region
    $region2: #{tpu_custom_call.1} parent=1 // pred_check
      _
    $region3: #{tpu_custom_call.1} parent=1 // pred_check_branch
      %20 = sbr.rel (0) target = $region5
    $region4: #{tpu_custom_call.1} parent=1 // pred_region
      %s22 = ssub.s32 16, 16
      %23 = vsyncadd [#allocation5], %s22
      %26 = dma.hbm_to_smem %s0, 16, [#allocation2], [#allocation5]
    $region5: #{tpu_custom_call.1} parent=1 // pred_fallthru
      _
    // Predicated region
    $region6: #{tpu_custom_call.1} parent=1 // pred_check
      _
    $region7: #{tpu_custom_call.1} parent=1 // pred_check_branch
      %28 = sbr.rel (0) target = $region9
    $region8: #{tpu_custom_call.1} parent=1 // pred_region
      _
    $region9: #{tpu_custom_call.1} parent=1 // pred_fallthru
      _
    // Predicated region
    $region10: #{tpu_custom_call.1} parent=1 // pred_check
      _
    $region11: #{tpu_custom_call.1} parent=1 // pred_check_branch
      %30 = sbr.rel (0) target = $region13
    $region12: #{tpu_custom_call.1} parent=1 // pred_region
      %s32 = ssub.s32 128, 128
      %33 = vsyncadd [#allocation3], %s32
      %s35 = sshll.u32 [#allocation6], 4
      %s36 = int_to_ptr.vmem [resolvable:$true] %s35
      %38 = dma.hbm_to_vmem [thread:$0]  %s2, 128, %s36, [#allocation3]
    $region13: #{tpu_custom_call.1} parent=1 // pred_fallthru
      _
    // Predicated region
    $region14: #{tpu_custom_call.1} parent=1 // pred_check
      _
    $region15: #{tpu_custom_call.1} parent=1 // pred_check_branch
      %40 = sbr.rel (0) target = $region17
    $region16: #{tpu_custom_call.1} parent=1 // pred_region
      _
    $region17: #{tpu_custom_call.1} parent=1 // pred_fallthru
      _
    // Predicated region
    $region18: #{tpu_custom_call.1} parent=1 // pred_check
      _
    $region19: #{tpu_custom_call.1} parent=1 // pred_check_branch
      %42 = sbr.rel (0) target = $region21
    $region20: #{tpu_custom_call.1} parent=1 // pred_region
      %s44 = ssub.s32 128, 128
      %45 = vsyncadd [#allocation8], %s44
      %s47 = sshll.u32 [#allocation7], 4
      %s48 = int_to_ptr.vmem [resolvable:$true] %s47
      %50 = dma.hbm_to_vmem [thread:$0]  %s4, 128, %s48, [#allocation8]
    $region21: #{tpu_custom_call.1} parent=1 // pred_fallthru
      _
    // Predicated region
    $region22: #{tpu_custom_call.1} parent=1 // pred_check
      _
    $region23: #{tpu_custom_call.1} parent=1 // pred_check_branch
      %52 = sbr.rel (0) target = $region25
    $region24: #{tpu_custom_call.1} parent=1 // pred_region
      %s54 = ssub.s32 128, 128
      %55 = vsyncadd [#allocation8], %s54
      %s57 = sshll.u32 [#allocation9], 4
      %s58 = int_to_ptr.vmem [resolvable:$true] %s57
      %60 = dma.hbm_to_vmem [thread:$0]  %s5, 128, %s58, [#allocation8]
    $region25: #{tpu_custom_call.1} parent=1 // pred_fallthru
      _
    // Predicated region
    $region26: #{tpu_custom_call.1} parent=1 // pred_check
      _
    $region27: #{tpu_custom_call.1} parent=1 // pred_check_branch
      %62 = sbr.rel (0) target = $region29
    $region28: #{tpu_custom_call.1} parent=1 // pred_region
      _
    $region29: #{tpu_custom_call.1} parent=1 // pred_fallthru
      _
    // Predicated region
    $region30: #{tpu_custom_call.1} parent=1 // pred_check
      _
    $region31: #{tpu_custom_call.1} parent=1 // pred_check_branch
      %64 = sbr.rel (0) target = $region33
    $region32: #{tpu_custom_call.1} parent=1 // pred_region
      _
    $region33: #{tpu_custom_call.1} parent=1 // pred_fallthru
      _
    // Predicated region
    $region34: #{tpu_custom_call.1} parent=1 // pred_check
      _
    $region35: #{tpu_custom_call.1} parent=1 // pred_check_branch
      %66 = sbr.rel (0) target = $region37
    $region36: #{tpu_custom_call.1} parent=1 // pred_region
      _
    $region37: #{tpu_custom_call.1} parent=1 // pred_fallthru
      _
    // Predicated region
    $region38: #{tpu_custom_call.1} parent=1 // pred_check
      _
    $region39: #{tpu_custom_call.1} parent=1 // pred_check_branch
      %68 = sbr.rel (0) target = $region41
    $region40: #{tpu_custom_call.1} parent=1 // pred_region
      _
    $region41: #{tpu_custom_call.1} parent=1 // pred_fallthru
      _
    // Predicated region
    $region42: #{tpu_custom_call.1} parent=1 // pred_check
      _
    $region43: #{tpu_custom_call.1} parent=1 // pred_check_branch
      %70 = sbr.rel (0) target = $region45
    $region44: #{tpu_custom_call.1} parent=1 // pred_region
      %71 = dma.done [#allocation5], 16
    $region45: #{tpu_custom_call.1} parent=1 // pred_fallthru
      _
    // Predicated region
    $region46: #{tpu_custom_call.1} parent=1 // pred_check
      _
    $region47: #{tpu_custom_call.1} parent=1 // pred_check_branch
      %73 = sbr.rel (0) target = $region49
    $region48: #{tpu_custom_call.1} parent=1 // pred_region
      %74 = dma.done [#allocation3], 128
    $region49: #{tpu_custom_call.1} parent=1 // pred_fallthru
      _
    // Predicated region
    $region50: #{tpu_custom_call.1} parent=1 // pred_check
      _
    $region51: #{tpu_custom_call.1} parent=1 // pred_check_branch
      %76 = sbr.rel (0) target = $region53
    $region52: #{tpu_custom_call.1} parent=1 // pred_region
      %77 = dma.done [#allocation8], 128
    $region53: #{tpu_custom_call.1} parent=1 // pred_fallthru
      _
    // Predicated region
    $region54: #{tpu_custom_call.1} parent=1 // pred_check
      _
    $region55: #{tpu_custom_call.1} parent=1 // pred_check_branch
      %79 = sbr.rel (0) target = $region57
    $region56: #{tpu_custom_call.1} parent=1 // pred_region
      %80 = dma.done [#allocation8], 128
    $region57: #{tpu_custom_call.1} parent=1 // pred_fallthru
      _
    %81 = sfence
    %v82 = vld [vmem:[%s1] sm:$0xff]
    %v83 = vld [vmem:[#allocation6] sm:$0xff]
    %v84 = vld [vmem:[%s3] sm:$0xff]
    %v85 = vld [vmem:[%s6] sm:$0xf]
    %v86 = vld [vmem:[%s7] sm:$0xf]
    %88 = vset.pattern.permute.xlu0 0
    %89 = vperm.xlu0 %88, %v85
    %v90 = vpop.permute.xlu0 %89
    %v93 = vlaneseq
    %v94 = vshrl.u32 %v93, 7
    %v95 = vsub.s32 0, %v94
    %v96 = vrot.slane %v82, %v95
    %v97 = vlaneseq
    %v98 = vshrl.u32 %v97, 7
    %v99 = vsub.s32 4, %v98
    %v100 = vrot.slane %v82, %v99
    %v103 = vlaneseq
    %v104 = vshrl.u32 %v103, 7
    %v105 = vsub.s32 0, %v104
    %v106 = vrot.slane %v96, %v105
    %v107 = vlaneseq
    %v108 = vshrl.u32 %v107, 7
    %v109 = vsub.s32 0, %v108
    %v110 = vrot.slane %v100, %v109
    %v111 = vmul.f32 %v90, %v106
    %v112 = vmul.f32 %v90, %v110
    %113 = vset.pattern.permute.xlu0 1
    %114 = vperm.xlu0 %113, %v85
    %v115 = vpop.permute.xlu0 %114
    %v117 = vlaneseq
    %v118 = vshrl.u32 %v117, 7
    %v119 = vsub.s32 1, %v118
    %v120 = vrot.slane %v82, %v119
    %v121 = vlaneseq
    %v122 = vshrl.u32 %v121, 7
    %v123 = vsub.s32 5, %v122
    %v124 = vrot.slane %v82, %v123
    %v127 = vlaneseq
    %v128 = vshrl.u32 %v127, 7
    %v129 = vsub.s32 1, %v128
    %v130 = vrot.slane %v120, %v129
    %v131 = vlaneseq
    %v132 = vshrl.u32 %v131, 7
    %v133 = vsub.s32 1, %v132
    %v134 = vrot.slane %v124, %v133
    %v135 = vmul.f32 %v115, %v130
    %v136 = vmul.f32 %v115, %v134
    %v137 = vadd.f32 %v111, %v135
    %v138 = vadd.f32 %v112, %v136
    %139 = vset.pattern.permute.xlu0 2
    %140 = vperm.xlu0 %139, %v85
    %v141 = vpop.permute.xlu0 %140
    %v143 = vlaneseq
    %v144 = vshrl.u32 %v143, 7
    %v145 = vsub.s32 2, %v144
    %v146 = vrot.slane %v82, %v145
    %v147 = vlaneseq
    %v148 = vshrl.u32 %v147, 7
    %v149 = vsub.s32 6, %v148
    %v150 = vrot.slane %v82, %v149
    %v153 = vlaneseq
    %v154 = vshrl.u32 %v153, 7
    %v155 = vsub.s32 2, %v154
    %v156 = vrot.slane %v146, %v155
    %v157 = vlaneseq
    %v158 = vshrl.u32 %v157, 7
    %v159 = vsub.s32 2, %v158
    %v160 = vrot.slane %v150, %v159
    %v161 = vmul.f32 %v141, %v156
    %v162 = vmul.f32 %v141, %v160
    %v163 = vadd.f32 %v137, %v161
    %v164 = vadd.f32 %v138, %v162
    %165 = vset.pattern.permute.xlu0 3
    %166 = vperm.xlu0 %165, %v85
    %v167 = vpop.permute.xlu0 %166
    %v169 = vlaneseq
    %v170 = vshrl.u32 %v169, 7
    %v171 = vsub.s32 3, %v170
    %v172 = vrot.slane %v82, %v171
    %v173 = vlaneseq
    %v174 = vshrl.u32 %v173, 7
    %v175 = vsub.s32 7, %v174
    %v176 = vrot.slane %v82, %v175
    %v179 = vlaneseq
    %v180 = vshrl.u32 %v179, 7
    %v181 = vsub.s32 3, %v180
    %v182 = vrot.slane %v172, %v181
    %v183 = vlaneseq
    %v184 = vshrl.u32 %v183, 7
    %v185 = vsub.s32 3, %v184
    %v186 = vrot.slane %v176, %v185
    %v187 = vmul.f32 %v167, %v182
    %v188 = vmul.f32 %v167, %v186
    %v189 = vadd.f32 %v163, %v187
    %v190 = vadd.f32 %v164, %v188
    %192 = vset.pattern.permute.xlu0 0
    %193 = vperm.xlu0 %192, %v86
    %v194 = vpop.permute.xlu0 %193
    %v197 = vlaneseq
    %v198 = vshrl.u32 %v197, 7
    %v199 = vsub.s32 0, %v198
    %v200 = vrot.slane %v83, %v199
    %v201 = vlaneseq
    %v202 = vshrl.u32 %v201, 7
    %v203 = vsub.s32 4, %v202
    %v204 = vrot.slane %v83, %v203
    %v207 = vlaneseq
    %v208 = vshrl.u32 %v207, 7
    %v209 = vsub.s32 0, %v208
    %v210 = vrot.slane %v200, %v209
    %v211 = vlaneseq
    %v212 = vshrl.u32 %v211, 7
    %v213 = vsub.s32 0, %v212
    %v214 = vrot.slane %v204, %v213
    %v215 = vmul.f32 %v194, %v210
    %v216 = vmul.f32 %v194, %v214
    %217 = vset.pattern.permute.xlu0 1
    %218 = vperm.xlu0 %217, %v86
    %v219 = vpop.permute.xlu0 %218
    %v221 = vlaneseq
    %v222 = vshrl.u32 %v221, 7
    %v223 = vsub.s32 1, %v222
    %v224 = vrot.slane %v83, %v223
    %v225 = vlaneseq
    %v226 = vshrl.u32 %v225, 7
    %v227 = vsub.s32 5, %v226
    %v228 = vrot.slane %v83, %v227
    %v231 = vlaneseq
    %v232 = vshrl.u32 %v231, 7
    %v233 = vsub.s32 1, %v232
    %v234 = vrot.slane %v224, %v233
    %v235 = vlaneseq
    %v236 = vshrl.u32 %v235, 7
    %v237 = vsub.s32 1, %v236
    %v238 = vrot.slane %v228, %v237
    %v239 = vmul.f32 %v219, %v234
    %v240 = vmul.f32 %v219, %v238
    %v241 = vadd.f32 %v215, %v239
    %v242 = vadd.f32 %v216, %v240
    %243 = vset.pattern.permute.xlu0 2
    %244 = vperm.xlu0 %243, %v86
    %v245 = vpop.permute.xlu0 %244
    %v247 = vlaneseq
    %v248 = vshrl.u32 %v247, 7
    %v249 = vsub.s32 2, %v248
    %v250 = vrot.slane %v83, %v249
    %v251 = vlaneseq
    %v252 = vshrl.u32 %v251, 7
    %v253 = vsub.s32 6, %v252
    %v254 = vrot.slane %v83, %v253
    %v257 = vlaneseq
    %v258 = vshrl.u32 %v257, 7
    %v259 = vsub.s32 2, %v258
    %v260 = vrot.slane %v250, %v259
    %v261 = vlaneseq
    %v262 = vshrl.u32 %v261, 7
    %v263 = vsub.s32 2, %v262
    %v264 = vrot.slane %v254, %v263
    %v265 = vmul.f32 %v245, %v260
    %v266 = vmul.f32 %v245, %v264
    %v267 = vadd.f32 %v241, %v265
    %v268 = vadd.f32 %v242, %v266
    %269 = vset.pattern.permute.xlu0 3
    %270 = vperm.xlu0 %269, %v86
    %v271 = vpop.permute.xlu0 %270
    %v273 = vlaneseq
    %v274 = vshrl.u32 %v273, 7
    %v275 = vsub.s32 3, %v274
    %v276 = vrot.slane %v83, %v275
    %v277 = vlaneseq
    %v278 = vshrl.u32 %v277, 7
    %v279 = vsub.s32 7, %v278
    %v280 = vrot.slane %v83, %v279
    %v283 = vlaneseq
    %v284 = vshrl.u32 %v283, 7
    %v285 = vsub.s32 3, %v284
    %v286 = vrot.slane %v276, %v285
    %v287 = vlaneseq
    %v288 = vshrl.u32 %v287, 7
    %v289 = vsub.s32 3, %v288
    %v290 = vrot.slane %v280, %v289
    %v291 = vmul.f32 %v271, %v286
    %v292 = vmul.f32 %v271, %v290
    %v293 = vadd.f32 %v267, %v291
    %v294 = vadd.f32 %v268, %v292
    %v296 = vlaneseq
    %v297 = vshrl.u32 %v296, 7
    %v298 = vsub.s32 0, %v297
    %v299 = vrot.slane %v84, %v298
    %v300 = vlaneseq
    %v301 = vshrl.u32 %v300, 7
    %v302 = vsub.s32 4, %v301
    %v303 = vrot.slane %v84, %v302
    %v306 = vlaneseq
    %v307 = vshrl.u32 %v306, 7
    %v308 = vsub.s32 0, %v307
    %v309 = vrot.slane %v299, %v308
    %v310 = vlaneseq
    %v311 = vshrl.u32 %v310, 7
    %v312 = vsub.s32 0, %v311
    %v313 = vrot.slane %v303, %v312
    %v314 = vmul.f32 %v194, %v309
    %v315 = vmul.f32 %v194, %v313
    %v316 = vlaneseq
    %v317 = vshrl.u32 %v316, 7
    %v318 = vsub.s32 1, %v317
    %v319 = vrot.slane %v84, %v318
    %v320 = vlaneseq
    %v321 = vshrl.u32 %v320, 7
    %v322 = vsub.s32 5, %v321
    %v323 = vrot.slane %v84, %v322
    %v326 = vlaneseq
    %v327 = vshrl.u32 %v326, 7
    %v328 = vsub.s32 1, %v327
    %v329 = vrot.slane %v319, %v328
    %v330 = vlaneseq
    %v331 = vshrl.u32 %v330, 7
    %v332 = vsub.s32 1, %v331
    %v333 = vrot.slane %v323, %v332
    %v334 = vmul.f32 %v219, %v329
    %v335 = vmul.f32 %v219, %v333
    %v336 = vadd.f32 %v314, %v334
    %v337 = vadd.f32 %v315, %v335
    %v338 = vlaneseq
    %v339 = vshrl.u32 %v338, 7
    %v340 = vsub.s32 2, %v339
    %v341 = vrot.slane %v84, %v340
    %v342 = vlaneseq
    %v343 = vshrl.u32 %v342, 7
    %v344 = vsub.s32 6, %v343
    %v345 = vrot.slane %v84, %v344
    %v348 = vlaneseq
    %v349 = vshrl.u32 %v348, 7
    %v350 = vsub.s32 2, %v349
    %v351 = vrot.slane %v341, %v350
    %v352 = vlaneseq
    %v353 = vshrl.u32 %v352, 7
    %v354 = vsub.s32 2, %v353
    %v355 = vrot.slane %v345, %v354
    %v356 = vmul.f32 %v245, %v351
    %v357 = vmul.f32 %v245, %v355
    %v358 = vadd.f32 %v336, %v356
    %v359 = vadd.f32 %v337, %v357
    %v360 = vlaneseq
    %v361 = vshrl.u32 %v360, 7
    %v362 = vsub.s32 3, %v361
    %v363 = vrot.slane %v84, %v362
    %v364 = vlaneseq
    %v365 = vshrl.u32 %v364, 7
    %v366 = vsub.s32 7, %v365
    %v367 = vrot.slane %v84, %v366
    %v370 = vlaneseq
    %v371 = vshrl.u32 %v370, 7
    %v372 = vsub.s32 3, %v371
    %v373 = vrot.slane %v363, %v372
    %v374 = vlaneseq
    %v375 = vshrl.u32 %v374, 7
    %v376 = vsub.s32 3, %v375
    %v377 = vrot.slane %v367, %v376
    %v378 = vmul.f32 %v271, %v373
    %v379 = vmul.f32 %v271, %v377
    %v380 = vadd.f32 %v358, %v378
    %v381 = vadd.f32 %v359, %v379
    %v382 = vld [vmem:[%s9] sm:$0xf]
    %v383 = vld [vmem:[#allocation7] sm:$0xff]
    %vm384 = vcmask 261120
    %v385 = vsel %vm384, %v383, 0.0
    %v386 = vrot.slane %v385, 4
    %v387 = vadd.f32 %v385, %v386
    %v388 = vrot.slane %v387, 2
    %v389 = vadd.f32 %v387, %v388
    %v390 = vrot.slane %v389, 1
    %v391 = vadd.f32 %v389, %v390
    %v392 = vrcp.pop 8.0
    %v393 = vmul.f32 %v391, %v392
    %v394 = vmul.f32 %v382, %v393
    %vm395 = vcmask 257024
    %v396 = vsel %vm395, %v394, 0.0
    %397 = vadd.xlane.f32.xlu0 %v396
    %v398 = vpop.xlane.xlu0 %397
    %v399 = vld [vmem:[#allocation9] sm:$0xff]
    %v400 = vsel %vm384, %v399, 0.0
    %v401 = vrot.slane %v400, 4
    %v402 = vadd.f32 %v400, %v401
    %v403 = vrot.slane %v402, 2
    %v404 = vadd.f32 %v402, %v403
    %v405 = vrot.slane %v404, 1
    %v406 = vadd.f32 %v404, %v405
    %v407 = vmul.f32 %v406, %v392
    %v408 = vmul.f32 %v382, %v407
    %v409 = vsel %vm395, %v408, 0.0
    %410 = vadd.xlane.f32.xlu0 %v409
    %v411 = vpop.xlane.xlu0 %410
    %v412 = vld [vmem:[%s8] sm:$0xf]
    %s413 = sld [smem:[#allocation2 + $0x2]]
    %v414 = vadd.f32 %v189, %v293
    %v415 = vadd.f32 %v190, %v294
    %417 = vset.pattern.permute.xlu0 0
    %418 = vperm.xlu0 %417, %v412
    %v419 = vpop.permute.xlu0 %418
    %v421 = vadd.f32 %v414, %v419
    %v422 = vadd.f32 %v415, %v419
    %v423 = vadd.f32 %v421, %v398
    %v424 = vadd.f32 %v422, %v398
    %v425 = vstv %s413
    %v426 = vmul.f32 %v423, %v425
    %v427 = vmul.f32 %v424, %v425
    %v428 = vadd.f32 %v421, %v411
    %v429 = vadd.f32 %v422, %v411
    %v430 = vmul.f32 %v428, %v425
    %v431 = vmul.f32 %v429, %v425
    %v432 = vadd.f32 %v189, %v380
    %v433 = vadd.f32 %v190, %v381
    %v434 = vadd.f32 %v432, %v419
    %v435 = vadd.f32 %v433, %v419
    %v436 = vadd.f32 %v434, %v411
    %v437 = vadd.f32 %v435, %v411
    %v438 = vmul.f32 %v436, %v425
    %v439 = vmul.f32 %v437, %v425
    %s440 = sld [smem:[#allocation2]]
    %s441 = sld [smem:[#allocation2 + $0x1]]
    %v442 = vsub.f32 %v426, %v430
    %v443 = vsub.f32 %v427, %v431
    %v444 = vstv %s440
    %v445 = vmul.f32 %v444, %v442
    %v446 = vmul.f32 %v444, %v443
    %v447 = vadd.f32 %v438, %v445
    %v448 = vadd.f32 %v439, %v446
    %v449 = vsub.f32 %v430, %v438
    %v450 = vsub.f32 %v431, %v439
    %v451 = vstv %s441
    %v452 = vmul.f32 %v451, %v449
    %v453 = vmul.f32 %v451, %v450
    %v454 = vadd.f32 %v447, %v452
    %v455 = vadd.f32 %v448, %v453
    %v458 = vcombine.low %v454, %v455
    %460 = vst [vmem:[#allocation10] sm:$0xff] %v458
    // Predicated region
    $region58: #{tpu_custom_call.1} parent=1 // pred_check
      _
    $region59: #{tpu_custom_call.1} parent=1 // pred_check_branch
      %462 = sbr.rel (0) target = $region61
    $region60: #{tpu_custom_call.1} parent=1 // pred_region
      %s464 = ssub.s32 128, 128
      %465 = vsyncadd [#allocation4], %s464
      %s467 = sshll.u32 [#allocation10], 4
      %s468 = int_to_ptr.vmem [resolvable:$true] %s467
      %470 = dma.vmem_to_hbm [thread:$0]  %s468, 128, %s10, [#allocation4]
    $region61: #{tpu_custom_call.1} parent=1 // pred_fallthru
      _
    // Predicated region
    $region62: #{tpu_custom_call.1} parent=1 // pred_check
      _
    $region63: #{tpu_custom_call.1} parent=1 // pred_check_branch
      %472 = sbr.rel (0) target = $region65
    $region64: #{tpu_custom_call.1} parent=1 // pred_region
      %473 = dma.done [#allocation4], 128
    $region65: #{tpu_custom_call.1} parent=1 // pred_fallthru
      _
    %474 = vsyncpa [#allocation3], 1
    %475 = vsyncpa [#allocation8], 1
    %476 = vsyncpa [#allocation4], 1
    %477 = vsyncpa [#allocation5], 1

</llo_original>
